<compile_context>
chip_gen: v7x
topology: tpu7x:2x2x1
jax: 0.10.0
libtpu: 0.0.40
codegen_flags: <defaults>
</compile_context>

<pallas_src>
import jax
import jax.numpy as jnp
from jax.experimental import pallas as pl
from jax.experimental.pallas import tpu as pltpu


# --------------------------------------------------------------------------- #
# Kernel
# --------------------------------------------------------------------------- #
def tabular_mlp_kernel(x_ref, w1_ref, b1_ref, w2_ref, b2_ref, w3_ref, b3_ref,
                       out_ref):
    # Layer 1: Linear(n_in -> h1) (BN_cont folded into W1/b1) + ReLU.
    h = (jnp.dot(x_ref[...], w1_ref[...], preferred_element_type=jnp.float32)
         + b1_ref[...])
    h = jnp.maximum(h, 0.0)

    # Layer 2: Linear(h1 -> h2) (BN1 folded into W2/b2) + ReLU.
    # Cast the activation to the weight dtype only at the dot (keeps the
    # elementwise path f32 — important on v5e which has no bf16 VPU).
    h = (jnp.dot(h.astype(w2_ref.dtype), w2_ref[...],
                 preferred_element_type=jnp.float32) + b2_ref[...])
    h = jnp.maximum(h, 0.0)

    # Output head: Linear(h2 -> out_pad) (BN2 folded into W3/b3), lane-dense.
    out_ref[...] = (jnp.dot(h.astype(w3_ref.dtype), w3_ref[...],
                            preferred_element_type=jnp.float32)
                    + b3_ref[...]).astype(out_ref.dtype)


# --------------------------------------------------------------------------- #
# Wrapper
# --------------------------------------------------------------------------- #
def tabular_forward(x_emb, x_cont, folded_params, out_sz, *,
                    tb=None, compute_dtype=jnp.float32):
    """Fused MLP forward.  x_emb: (B, n_emb), x_cont: (B, n_cont)."""
    w1, b1, w2, b2, w3, b3 = folded_params

    # Single concatenated activation feeds a single W1 (concat folded away).
    x = jnp.concatenate([x_emb, x_cont], axis=1).astype(compute_dtype)
    B, n_in = x.shape
    h1, h2 = w1.shape[1], w2.shape[1]
    out_pad = w3.shape[1]

    # Weights may be cast (e.g. bf16 on v6e/v7x); biases stay f32 — they are
    # added to the f32 MXU accumulator.
    w1 = w1.astype(compute_dtype)
    w2 = w2.astype(compute_dtype)
    w3 = w3.astype(compute_dtype)
    b1, b2, b3 = (b.astype(jnp.float32) for b in (b1, b2, b3))

    # Batch tile: as large as practical (per-grid-step overhead dominates tiny
    # tiles), sublane-aligned (16 for bf16 packing, 8 for f32).
    sub = 16 if compute_dtype == jnp.bfloat16 else 8
    if tb is None:
        tb = min(B, 512)
    tb = max(sub, (tb // sub) * sub)

    # Pad the batch so every grid step is a full tile (no masked partial-block
    # handling on the last step).
    n_steps = pl.cdiv(B, tb)
    B_pad = n_steps * tb
    if B_pad != B:
        x = jnp.pad(x, ((0, B_pad - B), (0, 0)))

    batch_spec = lambda shape: pl.BlockSpec(shape, lambda i: (i, 0))
    const_spec = lambda shape: pl.BlockSpec(shape, lambda i: (0, 0))

    flops = 2 * B_pad * (n_in * h1 + h1 * h2 + h2 * out_pad)
    bytes_accessed = int(
        x.size * x.dtype.itemsize
        + sum(a.size * a.dtype.itemsize for a in (w1, b1, w2, b2, w3, b3))
        + B_pad * out_pad * 4)

    out = pl.pallas_call(
        tabular_mlp_kernel,
        out_shape=jax.ShapeDtypeStruct((B_pad, out_pad), jnp.float32),
        grid_spec=pltpu.PrefetchScalarGridSpec(
            num_scalar_prefetch=0,
            grid=(n_steps,),
            in_specs=[
                batch_spec((tb, n_in)),
                const_spec((n_in, h1)), const_spec((1, h1)),
                const_spec((h1, h2)), const_spec((1, h2)),
                const_spec((h2, out_pad)), const_spec((1, out_pad)),
            ],
            out_specs=batch_spec((tb, out_pad)),
        ),
        compiler_params=pltpu.CompilerParams(
            dimension_semantics=("parallel",)),
        cost_estimate=pl.CostEstimate(
            flops=flops, transcendentals=0, bytes_accessed=bytes_accessed),
    )(x, w1, b1, w2, b2, w3, b3)

    return out[:B, :out_sz]


# --------------------------------------------------------------------------- #
# Parameter construction (PyTorch-style raw params) and host-side folding
# --------------------------------------------------------------------------- #
def make_raw_params(key, emb_sizes, n_cont, layers, out_sz):
    """Synthetic parameters matching TabularModel.__init__ shapes."""
    keys = iter(jax.random.split(key, 64))
    nk = lambda: next(keys)

    emb_tables = [jax.random.normal(nk(), (ni, nf), jnp.float32) * 0.1
                  for ni, nf in emb_sizes]

    def bn_params(n):
        gamma = 1.0 + 0.1 * jax.random.normal(nk(), (n,), jnp.float32)
        beta = 0.1 * jax.random.normal(nk(), (n,), jnp.float32)
        mean = 0.1 * jax.random.normal(nk(), (n,), jnp.float32)
        var = jnp.abs(jax.random.normal(nk(), (n,), jnp.float32)) + 0.5
        return gamma, beta, mean, var

    bnc = bn_params(n_cont)

    n_emb = sum(nf for _, nf in emb_sizes)
    linears, bns = [], []
    n_in = n_emb + n_cont
    for h in layers:
        w = jax.random.normal(nk(), (n_in, h), jnp.float32) / jnp.sqrt(n_in)
        b = 0.1 * jax.random.normal(nk(), (h,), jnp.float32)
        linears.append((w, b))
        bns.append(bn_params(h))
        n_in = h
    w_out = jax.random.normal(nk(), (n_in, out_sz), jnp.float32) / jnp.sqrt(n_in)
    b_out = 0.1 * jax.random.normal(nk(), (out_sz,), jnp.float32)
    return emb_tables, bnc, linears, bns, (w_out, b_out)


def fold_params(n_emb, bnc, linears, bns, head, *, eps=1e-5, lane=128):
    """Fold eval-mode BN affines into adjacent Linear weights; pad the head."""
    def affine(bn):
        gamma, beta, mean, var = bn
        s = gamma / jnp.sqrt(var + eps)
        t = beta - mean * s
        return s, t

    (w1, b1), (w2, b2) = linears
    w3, b3 = head

    # BN over the continuous features precedes W1: scale the cont rows of W1.
    s_c, t_c = affine(bnc)
    w1f = w1.at[n_emb:, :].multiply(s_c[:, None])
    b1f = b1 + t_c @ w1[n_emb:, :]

    # BN1 follows ReLU1 and precedes W2: fold into W2/b2.
    s1, t1 = affine(bns[0])
    w2f = w2 * s1[:, None]
    b2f = b2 + t1 @ w2

    # BN2 follows ReLU2 and precedes the head: fold into W3/b3.
    s2, t2 = affine(bns[1])
    w3f = w3 * s2[:, None]
    b3f = b3 + t2 @ w3

    # Pad the output head to a lane-dense width (unmasked stores).
    out_sz = w3f.shape[1]
    out_pad = max(lane, ((out_sz + lane - 1) // lane) * lane)
    w3p = jnp.zeros((w3f.shape[0], out_pad), jnp.float32).at[:, :out_sz].set(w3f)
    b3p = jnp.zeros((out_pad,), jnp.float32).at[:out_sz].set(b3f)

    folded = (w1f, b1f.reshape(1, -1), w2f, b2f.reshape(1, -1),
              w3p, b3p.reshape(1, -1))
    return folded, out_sz


# --------------------------------------------------------------------------- #
# Pure-JAX reference of TabularModel.forward (eval mode), unfolded params
# --------------------------------------------------------------------------- #
def reference_forward(x_cat, x_cont, emb_tables, bnc, linears, bns, head,
                      eps=1e-5):
    embs = [jnp.take(t, x_cat[:, i], axis=0) for i, t in enumerate(emb_tables)]
    x_emb = jnp.concatenate(embs, axis=1)

    def bn(x, p):
        g, b, m, v = p
        return (x - m) / jnp.sqrt(v + eps) * g + b

    x = jnp.concatenate([x_emb, bn(x_cont, bnc)], axis=1)
    for (w, b), bnp in zip(linears, bns):
        x = jnp.maximum(x @ w + b, 0.0)
        x = bn(x, bnp)
    w3, b3 = head
    return x @ w3 + b3


# --------------------------------------------------------------------------- #
# Demo / self-check
# --------------------------------------------------------------------------- #
if __name__ == "__main__":
    # 6 categorical columns with (cardinality, emb_dim), 14 continuous
    # features, hidden layers [32, 16], 2 output classes.
    emb_sizes = [(2, 1), (2, 1), (4, 2), (9, 5), (7, 4), (5, 3)]
    n_cont, layers, out_sz = 14, [32, 16], 2
    B = 16

    key = jax.random.PRNGKey(0)
    k_par, k_cat, k_cont = jax.random.split(key, 3)

    emb_tables, bnc, linears, bns, head = make_raw_params(
        k_par, emb_sizes, n_cont, layers, out_sz)
    n_emb = sum(nf for _, nf in emb_sizes)
    folded, out_sz_f = fold_params(n_emb, bnc, linears, bns, head)

    cat_keys = jax.random.split(k_cat, len(emb_sizes))
    x_cat = jnp.stack(
        [jax.random.randint(cat_keys[i], (B,), 0, ni, dtype=jnp.int32)
         for i, (ni, _) in enumerate(emb_sizes)], axis=1)            # (B, 6)
    x_cont = jax.random.normal(k_cont, (B, n_cont), jnp.float32)     # (B, 14)

    # Embedding lookups (gather) stay in plain JAX glue; the concatenated
    # embedding block feeds the fused Pallas MLP kernel.
    x_emb = jnp.concatenate(
        [jnp.take(t, x_cat[:, i], axis=0) for i, t in enumerate(emb_tables)],
        axis=1)                                                      # (B, 16)

    # f32 operands by default (keeps the reference tolerance); pass
    # compute_dtype=jnp.bfloat16 on v6e/v7x for halved operand bytes.
    out = tabular_forward(x_emb, x_cont, folded, out_sz_f)
    out = jax.block_until_ready(out)

    ref = reference_forward(x_cat, x_cont, emb_tables, bnc, linears, bns, head)
    assert out.shape == (B, out_sz)
    assert jnp.allclose(out, ref, rtol=1e-4, atol=1e-4), "mismatch vs reference"

    print("KERNEL_OK")
</pallas_src>

<mosaic_0001>
module attributes {stable_mosaic.version = 11 : i64} {
  func.func @tabular_mlp_kernel(%arg0: i32, %arg1: memref<16x30xf32, #tpu.memory_space<vmem>>, %arg2: memref<30x32xf32, #tpu.memory_space<vmem>>, %arg3: memref<1x32xf32, #tpu.memory_space<vmem>>, %arg4: memref<32x16xf32, #tpu.memory_space<vmem>>, %arg5: memref<1x16xf32, #tpu.memory_space<vmem>>, %arg6: memref<16x128xf32, #tpu.memory_space<vmem>>, %arg7: memref<1x128xf32, #tpu.memory_space<vmem>>, %arg8: memref<16x128xf32, #tpu.memory_space<vmem>>) attributes {dimension_semantics = [#tpu.dimension_semantics<parallel>], iteration_bounds = array<i64: 1>, scalar_prefetch = 0 : i64, scratch_operands = 0 : i64, tpu.core_type = #tpu.core_type<tc>, window_params = [{transform_indices = @transform_0, window_bounds = array<i64: 16, 30>}, {pipeline_mode = #tpu.pipeline_mode<synchronous>, transform_indices = @transform_1, window_bounds = array<i64: 30, 32>}, {pipeline_mode = #tpu.pipeline_mode<synchronous>, transform_indices = @transform_2, window_bounds = array<i64: 1, 32>}, {pipeline_mode = #tpu.pipeline_mode<synchronous>, transform_indices = @transform_3, window_bounds = array<i64: 32, 16>}, {pipeline_mode = #tpu.pipeline_mode<synchronous>, transform_indices = @transform_4, window_bounds = array<i64: 1, 16>}, {pipeline_mode = #tpu.pipeline_mode<synchronous>, transform_indices = @transform_5, window_bounds = array<i64: 16, 128>}, {pipeline_mode = #tpu.pipeline_mode<synchronous>, transform_indices = @transform_6, window_bounds = array<i64: 1, 128>}, {transform_indices = @transform_7, window_bounds = array<i64: 16, 128>}]} {
    %c0 = arith.constant 0 : index
    %c0_0 = arith.constant 0 : index
    %0 = vector.load %arg1[%c0, %c0_0] : memref<16x30xf32, #tpu.memory_space<vmem>>, vector<16x30xf32>
    %c0_1 = arith.constant 0 : index
    %c0_2 = arith.constant 0 : index
    %1 = vector.load %arg2[%c0_1, %c0_2] : memref<30x32xf32, #tpu.memory_space<vmem>>, vector<30x32xf32>
    %cst = arith.constant dense<0.000000e+00> : vector<16x32xf32>
    %2 = tpu.matmul %0, %1, %cst {dimension_numbers = #tpu.dot_dimension_numbers<[1], [0], [0], [1], [0, 0, 1, 1], [], []>} : vector<16x30xf32>, vector<30x32xf32>, vector<16x32xf32> -> vector<16x32xf32>
    %c0_3 = arith.constant 0 : index
    %c0_4 = arith.constant 0 : index
    %3 = vector.load %arg3[%c0_3, %c0_4] : memref<1x32xf32, #tpu.memory_space<vmem>>, vector<1x32xf32>
    %4 = vector.broadcast %3 : vector<1x32xf32> to vector<16x32xf32>
    %5 = arith.addf %2, %4 : vector<16x32xf32>
    %cst_5 = arith.constant 0.000000e+00 : f32
    %6 = vector.broadcast %cst_5 : f32 to vector<16x32xf32>
    %7 = arith.maximumf %5, %6 : vector<16x32xf32>
    %c0_6 = arith.constant 0 : index
    %c0_7 = arith.constant 0 : index
    %8 = vector.load %arg4[%c0_6, %c0_7] : memref<32x16xf32, #tpu.memory_space<vmem>>, vector<32x16xf32>
    %cst_8 = arith.constant dense<0.000000e+00> : vector<16x16xf32>
    %9 = tpu.matmul %7, %8, %cst_8 {dimension_numbers = #tpu.dot_dimension_numbers<[1], [0], [0], [1], [0, 0, 1, 1], [], []>} : vector<16x32xf32>, vector<32x16xf32>, vector<16x16xf32> -> vector<16x16xf32>
    %c0_9 = arith.constant 0 : index
    %c0_10 = arith.constant 0 : index
    %10 = vector.load %arg5[%c0_9, %c0_10] : memref<1x16xf32, #tpu.memory_space<vmem>>, vector<1x16xf32>
    %11 = vector.broadcast %10 : vector<1x16xf32> to vector<16x16xf32>
    %12 = arith.addf %9, %11 : vector<16x16xf32>
    %cst_11 = arith.constant 0.000000e+00 : f32
    %13 = vector.broadcast %cst_11 : f32 to vector<16x16xf32>
    %14 = arith.maximumf %12, %13 : vector<16x16xf32>
    %c0_12 = arith.constant 0 : index
    %c0_13 = arith.constant 0 : index
    %15 = vector.load %arg6[%c0_12, %c0_13] : memref<16x128xf32, #tpu.memory_space<vmem>>, vector<16x128xf32>
    %cst_14 = arith.constant dense<0.000000e+00> : vector<16x128xf32>
    %16 = tpu.matmul %14, %15, %cst_14 {dimension_numbers = #tpu.dot_dimension_numbers<[1], [0], [0], [1], [0, 0, 1, 1], [], []>} : vector<16x16xf32>, vector<16x128xf32>, vector<16x128xf32> -> vector<16x128xf32>
    %c0_15 = arith.constant 0 : index
    %c0_16 = arith.constant 0 : index
    %17 = vector.load %arg7[%c0_15, %c0_16] : memref<1x128xf32, #tpu.memory_space<vmem>>, vector<1x128xf32>
    %18 = vector.broadcast %17 : vector<1x128xf32> to vector<16x128xf32>
    %19 = arith.addf %16, %18 : vector<16x128xf32>
    %c0_17 = arith.constant 0 : index
    %c0_18 = arith.constant 0 : index
    %20 = vector.load %arg8[%c0_17, %c0_18] : memref<16x128xf32, #tpu.memory_space<vmem>>, vector<16x128xf32>
    tpu.vector_store %arg8[%c0_17, %c0_18], %19 {strides = array<i32>} : memref<16x128xf32, #tpu.memory_space<vmem>>, vector<16x128xf32>,
    return
  }
  func.func @transform_0(%arg0: i32) -> (i32, i32) {
    %c0_i32 = arith.constant 0 : i32
    %c0_i32_0 = arith.constant 0 : i32
    return %arg0, %c0_i32 : i32, i32
  }
  func.func @transform_1(%arg0: i32) -> (i32, i32) {
    %c0_i32 = arith.constant 0 : i32
    %c0_i32_0 = arith.constant 0 : i32
    %c0_i32_1 = arith.constant 0 : i32
    return %c0_i32, %c0_i32_0 : i32, i32
  }
  func.func @transform_2(%arg0: i32) -> (i32, i32) {
    %c0_i32 = arith.constant 0 : i32
    %c0_i32_0 = arith.constant 0 : i32
    %c0_i32_1 = arith.constant 0 : i32
    return %c0_i32, %c0_i32_0 : i32, i32
  }
  func.func @transform_3(%arg0: i32) -> (i32, i32) {
    %c0_i32 = arith.constant 0 : i32
    %c0_i32_0 = arith.constant 0 : i32
    %c0_i32_1 = arith.constant 0 : i32
    return %c0_i32, %c0_i32_0 : i32, i32
  }
  func.func @transform_4(%arg0: i32) -> (i32, i32) {
    %c0_i32 = arith.constant 0 : i32
    %c0_i32_0 = arith.constant 0 : i32
    %c0_i32_1 = arith.constant 0 : i32
    return %c0_i32, %c0_i32_0 : i32, i32
  }
  func.func @transform_5(%arg0: i32) -> (i32, i32) {
    %c0_i32 = arith.constant 0 : i32
    %c0_i32_0 = arith.constant 0 : i32
    %c0_i32_1 = arith.constant 0 : i32
    return %c0_i32, %c0_i32_0 : i32, i32
  }
  func.func @transform_6(%arg0: i32) -> (i32, i32) {
    %c0_i32 = arith.constant 0 : i32
    %c0_i32_0 = arith.constant 0 : i32
    %c0_i32_1 = arith.constant 0 : i32
    return %c0_i32, %c0_i32_0 : i32, i32
  }
  func.func @transform_7(%arg0: i32) -> (i32, i32) {
    %c0_i32 = arith.constant 0 : i32
    %c0_i32_0 = arith.constant 0 : i32
    return %arg0, %c0_i32 : i32, i32
  }
}

</mosaic_0001>

<llo_original>
// kernel: tpu_custom_call.1
$region0: #{tpu_custom_call.1}
  #allocation0 [shape = 'u32[]', space=smem, size = 0x4, offset = 0x4, fixed_abs, tag = 'smem constant byte address 0x4 - core index']
  #allocation1 [shape = 'u32[144,128]{1,0:T(1,128)}', space=vmem, size = 0x12000, scoped, tag = 'internal scratch']
  %s0 = inlined_call_operand.vmem [shape: f32[16,30], index: 0, kind: input, shape index: {}]
  %s1 = inlined_call_operand.vmem [shape: f32[30,32], index: 1, kind: input, shape index: {}]
  %s2 = inlined_call_operand.vmem [shape: f32[1,32], index: 2, kind: input, shape index: {}]
  %s3 = inlined_call_operand.vmem [shape: f32[32,16], index: 3, kind: input, shape index: {}]
  %s4 = inlined_call_operand.vmem [shape: f32[1,16], index: 4, kind: input, shape index: {}]
  %s5 = inlined_call_operand.vmem [shape: f32[16,128], index: 5, kind: input, shape index: {}]
  %s6 = inlined_call_operand.vmem [shape: f32[1,128], index: 6, kind: input, shape index: {}]
  %s7 = inlined_call_operand.hbm [shape: f32[16,128], index: 7, kind: output, shape index: {}]
  %s8 = sld [smem:[#allocation0]]
  $region38: #{tpu_custom_call.1} parent=0
    _
  %s10 = ssub.s32 1, %s8
  %s11 = scalar_select 0, %s10, %s8
  $region1: #{tpu_custom_call.1} parent=0
    #allocation2 [shape = 'u8[8192]{0}', space=vmem, size = 0x2000, scoped, tag = 'output window, operand 0, single buffered']
    #allocation3 [shape = 's32[1]{0}', space=sflag, size = 0x4, scoped, tag = 'scoped memory for tpu_custom_call.1']
    %12 = vsyncpa [#allocation3], 0
    // Predicated region
    $region2: #{tpu_custom_call.1} parent=1 // pred_check
      _
    $region3: #{tpu_custom_call.1} parent=1 // pred_check_branch
      %14 = sbr.rel (0) target = $region5
    $region4: #{tpu_custom_call.1} parent=1 // pred_region
      _
    $region5: #{tpu_custom_call.1} parent=1 // pred_fallthru
      _
    // Predicated region
    $region6: #{tpu_custom_call.1} parent=1 // pred_check
      _
    $region7: #{tpu_custom_call.1} parent=1 // pred_check_branch
      %16 = sbr.rel (0) target = $region9
    $region8: #{tpu_custom_call.1} parent=1 // pred_region
      _
    $region9: #{tpu_custom_call.1} parent=1 // pred_fallthru
      _
    // Predicated region
    $region10: #{tpu_custom_call.1} parent=1 // pred_check
      _
    $region11: #{tpu_custom_call.1} parent=1 // pred_check_branch
      %18 = sbr.rel (0) target = $region13
    $region12: #{tpu_custom_call.1} parent=1 // pred_region
      _
    $region13: #{tpu_custom_call.1} parent=1 // pred_fallthru
      _
    // Predicated region
    $region14: #{tpu_custom_call.1} parent=1 // pred_check
      _
    $region15: #{tpu_custom_call.1} parent=1 // pred_check_branch
      %20 = sbr.rel (0) target = $region17
    $region16: #{tpu_custom_call.1} parent=1 // pred_region
      _
    $region17: #{tpu_custom_call.1} parent=1 // pred_fallthru
      _
    // Predicated region
    $region18: #{tpu_custom_call.1} parent=1 // pred_check
      _
    $region19: #{tpu_custom_call.1} parent=1 // pred_check_branch
      %22 = sbr.rel (0) target = $region21
    $region20: #{tpu_custom_call.1} parent=1 // pred_region
      _
    $region21: #{tpu_custom_call.1} parent=1 // pred_fallthru
      _
    // Predicated region
    $region22: #{tpu_custom_call.1} parent=1 // pred_check
      _
    $region23: #{tpu_custom_call.1} parent=1 // pred_check_branch
      %24 = sbr.rel (0) target = $region25
    $region24: #{tpu_custom_call.1} parent=1 // pred_region
      _
    $region25: #{tpu_custom_call.1} parent=1 // pred_fallthru
      _
    // Predicated region
    $region26: #{tpu_custom_call.1} parent=1 // pred_check
      _
    $region27: #{tpu_custom_call.1} parent=1 // pred_check_branch
      %26 = sbr.rel (0) target = $region29
    $region28: #{tpu_custom_call.1} parent=1 // pred_region
      _
    $region29: #{tpu_custom_call.1} parent=1 // pred_fallthru
      _
    %v27 = vld [vmem:[%s0] sm:$0xff]
    %v28 = vld [vmem:[%s0 + $0x8] sm:$0xff]
    %v29 = vld [vmem:[%s1] sm:$0xff]
    %v30 = vld [vmem:[%s1 + $0x8] sm:$0xff]
    %v31 = vld [vmem:[%s1 + $0x10] sm:$0xff]
    %v32 = vld [vmem:[%s1 + $0x18] sm:$0x3f]
    %v33 = vld [vmem:[%s2] sm:$0x1]
    %v35 = vlaneseq
    %v36 = vshrl.u32 %v35, 7
    %v37 = vsub.s32 0, %v36
    %v38 = vrot.slane %v33, %v37
    %vm40 = vcmask 244736
    %v42 = vsel %vm40, %v27, 0
    %v45 = vsel %vm40, %v28, 0
    %vm47 = vcmask 1045504
    %v49 = vsel %vm47, %v32, 0
    %51 = vmatprep.subr.mxu0 0.0
    %52 = vmatpush1.msra.mxu0 %v29
    %53 = vmatprep.subr.mxu0 0.0
    %54 = vmatpush1.msra.mxu0 %v30
    %55 = vmatprep.subr.mxu0 0.0
    %56 = vmatpush1.msra.mxu0 %v31
    %57 = vmatprep.subr.mxu0 0.0
    %58 = vmatpush1.msra.mxu0 %v49
    %59 = vmatprep.subr.mxu0 0.0
    %60 = vmatpush1.msra.mxu0 0.0
    %61 = vmatprep.subr.mxu0 0.0
    %62 = vmatpush1.msra.mxu0 0.0
    %63 = vmatprep.subr.mxu0 0.0
    %64 = vmatpush1.msra.mxu0 0.0
    %65 = vmatprep.subr.mxu0 0.0
    %66 = vmatpush1.msra.mxu0 0.0
    %67 = vmatprep.subr.mxu0 0.0
    %68 = vmatpush1.msra.mxu0 0.0
    %69 = vmatprep.subr.mxu0 0.0
    %70 = vmatpush1.msra.mxu0 0.0
    %71 = vmatprep.subr.mxu0 0.0
    %72 = vmatpush1.msra.mxu0 0.0
    %73 = vmatprep.subr.mxu0 0.0
    %74 = vmatpush1.msra.mxu0 0.0
    %75 = vmatprep.subr.mxu0 0.0
    %76 = vmatpush1.msra.mxu0 0.0
    %77 = vmatprep.subr.mxu0 0.0
    %78 = vmatpush1.msra.mxu0 0.0
    %79 = vmatprep.subr.mxu0 0.0
    %80 = vmatpush1.msra.mxu0 0.0
    %81 = vmatprep.subr.mxu0 0.0
    %82 = vmatpush1.msra.mxu0 0.0
    %83 = vmatprep.subr.mxu0 0.0
    %84 = vmatpush1.msra.mxu0 0.0
    %85 = vmatprep.subr.mxu0 0.0
    %86 = vmatpush1.msra.mxu0 0.0
    %87 = vmatprep.subr.mxu0 0.0
    %88 = vmatpush1.msra.mxu0 0.0
    %89 = vmatprep.subr.mxu0 0.0
    %90 = vmatpush1.msra.mxu0 0.0
    %91 = vmatprep.subr.mxu0 0.0
    %92 = vmatpush1.msra.mxu0 0.0
    %93 = vmatprep.subr.mxu0 0.0
    %94 = vmatpush1.msra.mxu0 0.0
    %95 = vmatprep.subr.mxu0 0.0
    %96 = vmatpush1.msra.mxu0 0.0
    %97 = vmatprep.subr.mxu0 0.0
    %98 = vmatpush1.msra.mxu0 0.0
    %99 = vmatprep.subr.mxu0 0.0
    %100 = vmatpush1.msra.mxu0 0.0
    %101 = vmatprep.subr.mxu0 0.0
    %102 = vmatpush1.msra.mxu0 0.0
    %103 = vmatprep.subr.mxu0 0.0
    %104 = vmatpush1.msra.mxu0 0.0
    %105 = vmatprep.subr.mxu0 0.0
    %106 = vmatpush1.msra.mxu0 0.0
    %107 = vmatprep.subr.mxu0 0.0
    %108 = vmatpush1.msra.mxu0 0.0
    %109 = vmatprep.subr.mxu0 0.0
    %110 = vmatpush1.msra.mxu0 0.0
    %111 = vmatprep.subr.mxu0 0.0
    %112 = vmatpush1.msra.mxu0 0.0
    %113 = vmatprep.subr.mxu0 0.0
    %114 = vmatpush1.msra.mxu0 0.0
    %115 = vmatprep.mubr.f32.mxu0 0.0
    %116 = vmatmul.mubr.f32.gmra.mrb[0].mxu0 %v42
    %v117 = vpop.f32.mrb[0].mxu0
    %v118 = vadd.f32 %v38, %v117
    %v119 = vpop.f32.mrb[0].mxu0
    %120 = vmatprep.mubr.f32.mxu0 0.0
    %121 = vmatmul.mubr.f32.gmra.mrb[0].mxu0 %v45
    %v122 = vpop.f32.mrb[0].mxu0
    %v123 = vadd.f32 %v38, %v122
    %v124 = vpop.f32.mrb[0].mxu0
    %125 = vdwg.mxu0
    %v126 = vmax.f32 %v118, 0.0
    %v127 = vmax.f32 %v123, 0.0
    %v128 = vld [vmem:[%s3] sm:$0xff]
    %v129 = vld [vmem:[%s3 + $0x8] sm:$0xff]
    %v130 = vld [vmem:[%s3 + $0x10] sm:$0xff]
    %v131 = vld [vmem:[%s3 + $0x18] sm:$0xff]
    %v132 = vld [vmem:[%s4] sm:$0x1]
    %v134 = vlaneseq
    %v135 = vshrl.u32 %v134, 7
    %v136 = vsub.s32 0, %v135
    %v137 = vrot.slane %v132, %v136
    %vm139 = vcmask 261120
    %v141 = vsel %vm139, %v126, 0
    %v144 = vsel %vm139, %v127, 0
    %146 = vmatprep.subr.mxu0 0.0
    %147 = vmatpush1.msra.mxu0 %v128
    %148 = vmatprep.subr.mxu0 0.0
    %149 = vmatpush1.msra.mxu0 %v129
    %150 = vmatprep.subr.mxu0 0.0
    %151 = vmatpush1.msra.mxu0 %v130
    %152 = vmatprep.subr.mxu0 0.0
    %153 = vmatpush1.msra.mxu0 %v131
    %154 = vmatprep.subr.mxu0 0.0
    %155 = vmatpush1.msra.mxu0 0.0
    %156 = vmatprep.subr.mxu0 0.0
    %157 = vmatpush1.msra.mxu0 0.0
    %158 = vmatprep.subr.mxu0 0.0
    %159 = vmatpush1.msra.mxu0 0.0
    %160 = vmatprep.subr.mxu0 0.0
    %161 = vmatpush1.msra.mxu0 0.0
    %162 = vmatprep.subr.mxu0 0.0
    %163 = vmatpush1.msra.mxu0 0.0
    %164 = vmatprep.subr.mxu0 0.0
    %165 = vmatpush1.msra.mxu0 0.0
    %166 = vmatprep.subr.mxu0 0.0
    %167 = vmatpush1.msra.mxu0 0.0
    %168 = vmatprep.subr.mxu0 0.0
    %169 = vmatpush1.msra.mxu0 0.0
    %170 = vmatprep.subr.mxu0 0.0
    %171 = vmatpush1.msra.mxu0 0.0
    %172 = vmatprep.subr.mxu0 0.0
    %173 = vmatpush1.msra.mxu0 0.0
    %174 = vmatprep.subr.mxu0 0.0
    %175 = vmatpush1.msra.mxu0 0.0
    %176 = vmatprep.subr.mxu0 0.0
    %177 = vmatpush1.msra.mxu0 0.0
    %178 = vmatprep.subr.mxu0 0.0
    %179 = vmatpush1.msra.mxu0 0.0
    %180 = vmatprep.subr.mxu0 0.0
    %181 = vmatpush1.msra.mxu0 0.0
    %182 = vmatprep.subr.mxu0 0.0
    %183 = vmatpush1.msra.mxu0 0.0
    %184 = vmatprep.subr.mxu0 0.0
    %185 = vmatpush1.msra.mxu0 0.0
    %186 = vmatprep.subr.mxu0 0.0
    %187 = vmatpush1.msra.mxu0 0.0
    %188 = vmatprep.subr.mxu0 0.0
    %189 = vmatpush1.msra.mxu0 0.0
    %190 = vmatprep.subr.mxu0 0.0
    %191 = vmatpush1.msra.mxu0 0.0
    %192 = vmatprep.subr.mxu0 0.0
    %193 = vmatpush1.msra.mxu0 0.0
    %194 = vmatprep.subr.mxu0 0.0
    %195 = vmatpush1.msra.mxu0 0.0
    %196 = vmatprep.subr.mxu0 0.0
    %197 = vmatpush1.msra.mxu0 0.0
    %198 = vmatprep.subr.mxu0 0.0
    %199 = vmatpush1.msra.mxu0 0.0
    %200 = vmatprep.subr.mxu0 0.0
    %201 = vmatpush1.msra.mxu0 0.0
    %202 = vmatprep.subr.mxu0 0.0
    %203 = vmatpush1.msra.mxu0 0.0
    %204 = vmatprep.subr.mxu0 0.0
    %205 = vmatpush1.msra.mxu0 0.0
    %206 = vmatprep.subr.mxu0 0.0
    %207 = vmatpush1.msra.mxu0 0.0
    %208 = vmatprep.subr.mxu0 0.0
    %209 = vmatpush1.msra.mxu0 0.0
    %210 = vmatprep.mubr.f32.mxu0 0.0
    %211 = vmatmul.mubr.f32.gmra.mrb[0].mxu0 %v141
    %v212 = vpop.f32.mrb[0].mxu0
    %v213 = vadd.f32 %v137, %v212
    %v214 = vpop.f32.mrb[0].mxu0
    %215 = vmatprep.mubr.f32.mxu0 0.0
    %216 = vmatmul.mubr.f32.gmra.mrb[0].mxu0 %v144
    %v217 = vpop.f32.mrb[0].mxu0
    %v218 = vadd.f32 %v137, %v217
    %v219 = vpop.f32.mrb[0].mxu0
    %220 = vdwg.mxu0
    %v221 = vmax.f32 %v213, 0.0
    %v222 = vmax.f32 %v218, 0.0
    %v223 = vld [vmem:[%s5] sm:$0xff]
    %v224 = vld [vmem:[%s5 + $0x8] sm:$0xff]
    %v225 = vld [vmem:[%s6] sm:$0x1]
    %v227 = vlaneseq
    %v228 = vshrl.u32 %v227, 7
    %v229 = vsub.s32 0, %v228
    %v230 = vrot.slane %v225, %v229
    %vm232 = vcmask 130048
    %v234 = vsel %vm232, %v221, 0
    %v237 = vsel %vm232, %v222, 0
    %239 = vmatprep.subr.mxu0 0.0
    %240 = vmatpush1.msra.mxu0 %v223
    %241 = vmatprep.subr.mxu0 0.0
    %242 = vmatpush1.msra.mxu0 %v224
    %243 = vmatprep.subr.mxu0 0.0
    %244 = vmatpush1.msra.mxu0 0.0
    %245 = vmatprep.subr.mxu0 0.0
    %246 = vmatpush1.msra.mxu0 0.0
    %247 = vmatprep.subr.mxu0 0.0
    %248 = vmatpush1.msra.mxu0 0.0
    %249 = vmatprep.subr.mxu0 0.0
    %250 = vmatpush1.msra.mxu0 0.0
    %251 = vmatprep.subr.mxu0 0.0
    %252 = vmatpush1.msra.mxu0 0.0
    %253 = vmatprep.subr.mxu0 0.0
    %254 = vmatpush1.msra.mxu0 0.0
    %255 = vmatprep.subr.mxu0 0.0
    %256 = vmatpush1.msra.mxu0 0.0
    %257 = vmatprep.subr.mxu0 0.0
    %258 = vmatpush1.msra.mxu0 0.0
    %259 = vmatprep.subr.mxu0 0.0
    %260 = vmatpush1.msra.mxu0 0.0
    %261 = vmatprep.subr.mxu0 0.0
    %262 = vmatpush1.msra.mxu0 0.0
    %263 = vmatprep.subr.mxu0 0.0
    %264 = vmatpush1.msra.mxu0 0.0
    %265 = vmatprep.subr.mxu0 0.0
    %266 = vmatpush1.msra.mxu0 0.0
    %267 = vmatprep.subr.mxu0 0.0
    %268 = vmatpush1.msra.mxu0 0.0
    %269 = vmatprep.subr.mxu0 0.0
    %270 = vmatpush1.msra.mxu0 0.0
    %271 = vmatprep.subr.mxu0 0.0
    %272 = vmatpush1.msra.mxu0 0.0
    %273 = vmatprep.subr.mxu0 0.0
    %274 = vmatpush1.msra.mxu0 0.0
    %275 = vmatprep.subr.mxu0 0.0
    %276 = vmatpush1.msra.mxu0 0.0
    %277 = vmatprep.subr.mxu0 0.0
    %278 = vmatpush1.msra.mxu0 0.0
    %279 = vmatprep.subr.mxu0 0.0
    %280 = vmatpush1.msra.mxu0 0.0
    %281 = vmatprep.subr.mxu0 0.0
    %282 = vmatpush1.msra.mxu0 0.0
    %283 = vmatprep.subr.mxu0 0.0
    %284 = vmatpush1.msra.mxu0 0.0
    %285 = vmatprep.subr.mxu0 0.0
    %286 = vmatpush1.msra.mxu0 0.0
    %287 = vmatprep.subr.mxu0 0.0
    %288 = vmatpush1.msra.mxu0 0.0
    %289 = vmatprep.subr.mxu0 0.0
    %290 = vmatpush1.msra.mxu0 0.0
    %291 = vmatprep.subr.mxu0 0.0
    %292 = vmatpush1.msra.mxu0 0.0
    %293 = vmatprep.subr.mxu0 0.0
    %294 = vmatpush1.msra.mxu0 0.0
    %295 = vmatprep.subr.mxu0 0.0
    %296 = vmatpush1.msra.mxu0 0.0
    %297 = vmatprep.subr.mxu0 0.0
    %298 = vmatpush1.msra.mxu0 0.0
    %299 = vmatprep.subr.mxu0 0.0
    %300 = vmatpush1.msra.mxu0 0.0
    %301 = vmatprep.subr.mxu0 0.0
    %302 = vmatpush1.msra.mxu0 0.0
    %303 = vmatprep.mubr.f32.mxu0 0.0
    %304 = vmatmul.mubr.f32.gmra.mrb[0].mxu0 %v234
    %v305 = vpop.f32.mrb[0].mxu0
    %v306 = vadd.f32 %v230, %v305
    %v307 = vpop.f32.mrb[0].mxu0
    %308 = vmatprep.mubr.f32.mxu0 0.0
    %309 = vmatmul.mubr.f32.gmra.mrb[0].mxu0 %v237
    %v310 = vpop.f32.mrb[0].mxu0
    %v311 = vadd.f32 %v230, %v310
    %v312 = vpop.f32.mrb[0].mxu0
    %313 = vdwg.mxu0
    %314 = vst [vmem:[#allocation2] sm:$0xff] %v306
    %315 = vst [vmem:[#allocation2 + $0x8] sm:$0xff] %v311
    // Predicated region
    $region30: #{tpu_custom_call.1} parent=1 // pred_check
      _
    $region31: #{tpu_custom_call.1} parent=1 // pred_check_branch
      %317 = sbr.rel (0) target = $region33
    $region32: #{tpu_custom_call.1} parent=1 // pred_region
      %s319 = ssub.s32 256, 256
      %320 = vsyncadd [#allocation3], %s319
      %s321 = sshll.u32 [#allocation2], 4
      %s322 = int_to_ptr.vmem [resolvable:$true] %s321
      %327 = dma.vmem_to_hbm [thread:$0]  %s322, 256, %s7, [#allocation3], 128, 128, 8
    $region33: #{tpu_custom_call.1} parent=1 // pred_fallthru
      _
    // Predicated region
    $region34: #{tpu_custom_call.1} parent=1 // pred_check
      _
    $region35: #{tpu_custom_call.1} parent=1 // pred_check_branch
      %329 = sbr.rel (0) target = $region37
    $region36: #{tpu_custom_call.1} parent=1 // pred_region
      %330 = dma.done [#allocation3], 256
    $region37: #{tpu_custom_call.1} parent=1 // pred_fallthru
      _
    %331 = vsyncpa [#allocation3], 1

</llo_original>
